<compile_context>
chip_gen: v5e
topology: v5e:2x2
jax: 0.10.0
libtpu: 0.0.40
codegen_flags: <defaults>
</compile_context>

<pallas_src>
import functools

import jax
import jax.numpy as jnp
from jax.experimental import pallas as pl
from jax.experimental.pallas import tpu as pltpu

_LANES = 128
_SUBLANES = 8

# Streaming tile for the large-input path: 8192 rows x 128 lanes
# (f32: 4 MiB/operand/tile -> 2 operands x 2 pipeline buffers = 16 MiB).
_TILE_ROWS = 8192
# Inside a block, compute is strip-mined in 1024-row slices so live
# elementwise temporaries stay ~1.5 MiB.
_STRIP_ROWS = 1024
# Inputs with at most this many 128-lane rows take the single-block path.
_SINGLE_BLOCK_MAX_ROWS = 8192
# Leading "parallel" grid axis: lets megacore split the stream across the two
# TensorCores on v7x; harmless (sequential) on v5e/v6e.
_NUM_CHUNKS = 2
# 16 MiB of double-buffered input tiles + strip temporaries fit comfortably;
# within physical VMEM on v5e/v6e (128 MiB) and v7x (64 MiB).
_VMEM_LIMIT_BYTES = 40 * 1024 * 1024


def _sublane_granularity(dtype) -> int:
    """Minimum sublane multiple for the dtype's packed (sublane, 128) tiling."""
    return {4: 8, 2: 16, 1: 32}.get(jnp.dtype(dtype).itemsize, 8)


def _sq_diff_partials(p_ref, a_ref, *, row_offset, valid_rows):
    """(8,128) f32 partial sums of (p - a)^2 over this block.

    Strip-mined so elementwise temporaries stay small.  If `valid_rows` is not
    None, rows whose global index >= valid_rows (OOB garbage in the clipped
    last block or a clamped duplicate block) are zeroed BEFORE squaring.
    """
    block_rows = p_ref.shape[0]
    strip = min(_STRIP_ROWS, block_rows)
    if valid_rows is not None:
        # Hoist the iota out of the strip loop (JAX will not CSE it).
        base_iota = jax.lax.broadcasted_iota(jnp.int32, (strip, _LANES), 0)
    acc = jnp.zeros((_SUBLANES, _LANES), jnp.float32)
    for r0 in range(0, block_rows, strip):
        r1 = min(r0 + strip, block_rows)
        d = p_ref[r0:r1, :].astype(jnp.float32) - a_ref[r0:r1, :].astype(jnp.float32)
        if valid_rows is not None:
            if (r1 - r0) == strip:
                row = base_iota
            else:
                row = jax.lax.broadcasted_iota(jnp.int32, (r1 - r0, _LANES), 0)
            d = jnp.where(row_offset + r0 + row < valid_rows, d, 0.0)
        # Sublane-preserving fold: pure VPU adds into a vreg-shaped partial sum.
        acc = acc + (d * d).reshape(-1, _SUBLANES, _LANES).sum(axis=0)
    return acc


def _rmse_single_kernel(p_ref, a_ref, o_ref, *, inv_n):
    """Whole (zero-padded) problem in one block: reduce + mean + sqrt."""
    acc = _sq_diff_partials(p_ref, a_ref, row_offset=0, valid_rows=None)
    o_ref[...] = jnp.sqrt(jnp.sum(acc) * inv_n).reshape(1, 1)


def _rmse_tiled_kernel(p_ref, a_ref, o_ref, *, rows, tile_rows, tiles_per_chunk):
    """Streaming partial-sum kernel.

    grid = (chunks, tiles_per_chunk).  The output block (1, 8, 128) is indexed
    only by the chunk axis, so it stays VMEM-resident across the sequential
    tile axis and acts as that chunk's private accumulator (no scratch shared
    across the parallel axis).  The ragged tail is masked in-kernel.
    """
    c = pl.program_id(0)
    i = pl.program_id(1)

    @pl.when(i == 0)
    def _():
        o_ref[...] = jnp.zeros_like(o_ref)

    tile_idx = c * tiles_per_chunk + i          # logical (unclamped) tile index
    acc = _sq_diff_partials(
        p_ref, a_ref, row_offset=tile_idx * tile_rows, valid_rows=rows)
    o_ref[...] += acc.reshape(1, _SUBLANES, _LANES)


def rmse_loss(pred: jax.Array, actual: jax.Array) -> jax.Array:
    """sqrt(mean((pred - actual)**2)) computed in Pallas TPU kernels."""
    assert pred.shape == actual.shape, "pred/actual must have identical shapes"
    n = pred.size
    inv_n = 1.0 / float(n)            # static python float -> kernel literal

    p_flat = pred.reshape(-1)
    a_flat = actual.reshape(-1)
    rows_exact = pl.cdiv(n, _LANES)

    if rows_exact <= _SINGLE_BLOCK_MAX_ROWS:
        # Small input: one block, no grid machinery.  Pad BOTH operands with
        # zeros (contributes 0 to the sum) up to the dtype's packed (g, 128)
        # tile so the single DMA stays unmasked/packed; pad is a few KiB max.
        base = _sublane_granularity(pred.dtype) * _LANES
        pad = (-n) % base
        if pad:
            p_flat = jnp.pad(p_flat, (0, pad))
            a_flat = jnp.pad(a_flat, (0, pad))
        rows = p_flat.size // _LANES
        p2d = p_flat.reshape(rows, _LANES)
        a2d = a_flat.reshape(rows, _LANES)
        out = pl.pallas_call(
            functools.partial(_rmse_single_kernel, inv_n=inv_n),
            out_shape=jax.ShapeDtypeStruct((1, 1), jnp.float32),
            grid_spec=pltpu.PrefetchScalarGridSpec(
                num_scalar_prefetch=0,
                grid=(1,),
                in_specs=[
                    pl.BlockSpec((rows, _LANES), lambda i: (0, 0)),
                    pl.BlockSpec((rows, _LANES), lambda i: (0, 0)),
                ],
                out_specs=pl.BlockSpec((1, 1), lambda i: (0, 0)),
            ),
            compiler_params=pltpu.CompilerParams(
                dimension_semantics=("arbitrary",),
                vmem_limit_bytes=_VMEM_LIMIT_BYTES,
            ),
        )(p2d, a2d)
        return out[0, 0]

    # Large input.  Only pad to 128-lane granularity (needed for a lane-dense
    # 2-D view; no pad at all when n % 128 == 0, and never a pad to a tile
    # multiple) -- the ragged last tile is masked inside the kernel instead of
    # being materialized by an HBM->HBM jnp.pad copy.
    pad = (-n) % _LANES
    if pad:
        p_flat = jnp.pad(p_flat, (0, pad))
        a_flat = jnp.pad(a_flat, (0, pad))
    rows = p_flat.size // _LANES
    p2d = p_flat.reshape(rows, _LANES)
    a2d = a_flat.reshape(rows, _LANES)

    tiles_total = pl.cdiv(rows, _TILE_ROWS)
    tiles_per_chunk = pl.cdiv(tiles_total, _NUM_CHUNKS)

    def in_index(c, i):
        # Clamp so a (fully masked-out) duplicate tile is fetched instead of an
        # out-of-bounds block when tiles_total doesn't divide across chunks.
        t = jnp.minimum(c * tiles_per_chunk + i, tiles_total - 1)
        return (t, 0)

    kernel = functools.partial(
        _rmse_tiled_kernel,
        rows=rows, tile_rows=_TILE_ROWS, tiles_per_chunk=tiles_per_chunk)

    partials = pl.pallas_call(
        kernel,
        out_shape=jax.ShapeDtypeStruct(
            (_NUM_CHUNKS, _SUBLANES, _LANES), jnp.float32),
        grid_spec=pltpu.PrefetchScalarGridSpec(
            num_scalar_prefetch=0,
            grid=(_NUM_CHUNKS, tiles_per_chunk),
            in_specs=[
                pl.BlockSpec((_TILE_ROWS, _LANES), in_index),
                pl.BlockSpec((_TILE_ROWS, _LANES), in_index),
            ],
            out_specs=pl.BlockSpec(
                (1, _SUBLANES, _LANES), lambda c, i: (c, 0, 0)),
        ),
        compiler_params=pltpu.CompilerParams(
            dimension_semantics=("parallel", "arbitrary"),
            vmem_limit_bytes=_VMEM_LIMIT_BYTES,
        ),
    )(p2d, a2d)

    # Tiny combine of the per-chunk (8,128) partials + mean + sqrt.
    return jnp.sqrt(jnp.sum(partials) * inv_n)


if __name__ == "__main__":
    key = jax.random.PRNGKey(0)
    k1, k2, k3, k4 = jax.random.split(key, 4)

    # Small CNN-regression-head-sized example (NCHW): single-block path.
    pred = jax.random.normal(k1, (2, 4, 16, 16), dtype=jnp.float32)
    actual = jax.random.normal(k2, (2, 4, 16, 16), dtype=jnp.float32)
    loss = jax.block_until_ready(rmse_loss(pred, actual))
    ref = jnp.sqrt(jnp.mean((pred - actual) ** 2))
    assert jnp.allclose(loss, ref, rtol=1e-5, atol=1e-6), (loss, ref)

    # Larger ragged-length example: exercises the tiled/masked streaming path
    # (odd total tile count, length not a multiple of 128).
    n_big = (3 * _TILE_ROWS + 100) * _LANES + 57
    pred_b = jax.random.normal(k3, (n_big,), dtype=jnp.float32)
    actual_b = jax.random.normal(k4, (n_big,), dtype=jnp.float32)
    loss_b = jax.block_until_ready(rmse_loss(pred_b, actual_b))
    ref_b = jnp.sqrt(jnp.mean((pred_b - actual_b) ** 2))
    assert jnp.allclose(loss_b, ref_b, rtol=1e-4, atol=1e-6), (loss_b, ref_b)

    print("KERNEL_OK")
</pallas_src>

<mosaic_0001>
module attributes {stable_mosaic.version = 11 : i64} {
  func.func @_rmse_single_kernel(%arg0: i32, %arg1: memref<16x128xf32, #tpu.memory_space<vmem>>, %arg2: memref<16x128xf32, #tpu.memory_space<vmem>>, %arg3: memref<1x1xf32, #tpu.memory_space<vmem>>) attributes {dimension_semantics = [#tpu.dimension_semantics<arbitrary>], iteration_bounds = array<i64: 1>, scalar_prefetch = 0 : i64, scratch_operands = 0 : i64, tpu.core_type = #tpu.core_type<tc>, window_params = [{pipeline_mode = #tpu.pipeline_mode<synchronous>, transform_indices = @transform_0, window_bounds = array<i64: 16, 128>}, {pipeline_mode = #tpu.pipeline_mode<synchronous>, transform_indices = @transform_1, window_bounds = array<i64: 16, 128>}, {pipeline_mode = #tpu.pipeline_mode<synchronous>, transform_indices = @transform_2, window_bounds = array<i64: 1, 1>}]} {
    %cst = arith.constant 0.000000e+00 : f32
    %0 = vector.broadcast %cst : f32 to vector<8x128xf32>
    %c0 = arith.constant 0 : index
    %c0_0 = arith.constant 0 : index
    %1 = vector.load %arg1[%c0, %c0_0] : memref<16x128xf32, #tpu.memory_space<vmem>>, vector<16x128xf32>
    %c0_1 = arith.constant 0 : index
    %c0_2 = arith.constant 0 : index
    %2 = vector.load %arg2[%c0_1, %c0_2] : memref<16x128xf32, #tpu.memory_space<vmem>>, vector<16x128xf32>
    %3 = arith.subf %1, %2 : vector<16x128xf32>
    %4 = arith.mulf %3, %3 : vector<16x128xf32>
    %5 = vector.shape_cast %4 : vector<16x128xf32> to vector<2x8x128xf32>
    %cst_3 = arith.constant dense<0.000000e+00> : vector<8x128xf32>
    %6 = vector.multi_reduction <add>, %5, %cst_3 [0] : vector<2x8x128xf32> to vector<8x128xf32>
    %7 = arith.addf %0, %6 : vector<8x128xf32>
    %8 = vector.shape_cast %7 : vector<8x128xf32> to vector<1x8x128xf32>
    %cst_4 = arith.constant dense<0.000000e+00> : vector<1xf32>
    %9 = vector.multi_reduction <add>, %8, %cst_4 [1, 2] : vector<1x8x128xf32> to vector<1xf32>
    %10 = vector.shape_cast %9 : vector<1xf32> to vector<1x1x1xf32>
    %11 = vector.extract %10[0, 0, 0] : f32 from vector<1x1x1xf32>
    %cst_5 = arith.constant 4.8828125E-4 : f32
    %12 = arith.mulf %11, %cst_5 : f32
    %13 = math.sqrt %12 : f32
    %14 = vector.broadcast %13 : f32 to vector<1x1xf32>
    %c0_6 = arith.constant 0 : index
    %c0_7 = arith.constant 0 : index
    %15 = vector.load %arg3[%c0_6, %c0_7] : memref<1x1xf32, #tpu.memory_space<vmem>>, vector<1x1xf32>
    tpu.vector_store %arg3[%c0_6, %c0_7], %14 {strides = array<i32>} : memref<1x1xf32, #tpu.memory_space<vmem>>, vector<1x1xf32>,
    return
  }
  func.func @transform_0(%arg0: i32) -> (i32, i32) {
    %c0_i32 = arith.constant 0 : i32
    %c0_i32_0 = arith.constant 0 : i32
    %c0_i32_1 = arith.constant 0 : i32
    return %c0_i32, %c0_i32_0 : i32, i32
  }
  func.func @transform_1(%arg0: i32) -> (i32, i32) {
    %c0_i32 = arith.constant 0 : i32
    %c0_i32_0 = arith.constant 0 : i32
    %c0_i32_1 = arith.constant 0 : i32
    return %c0_i32, %c0_i32_0 : i32, i32
  }
  func.func @transform_2(%arg0: i32) -> (i32, i32) {
    %c0_i32 = arith.constant 0 : i32
    %c0_i32_0 = arith.constant 0 : i32
    %c0_i32_1 = arith.constant 0 : i32
    return %c0_i32, %c0_i32_0 : i32, i32
  }
}

</mosaic_0001>

<llo_original>
// kernel: tpu_custom_call.1
$region0: #{tpu_custom_call.1}
  #allocation0 [shape = 'u32[]', space=smem, size = 0x4, offset = 0x4, fixed_abs, tag = 'smem constant byte address 0x4 - core index']
  #allocation1 [shape = 'u32[72,128]{1,0:T(1,128)}', space=vmem, size = 0x9000, scoped, tag = 'internal scratch']
  %s0 = inlined_call_operand.hbm [shape: f32[16,128], index: 0, kind: input, shape index: {}]
  %s1 = inlined_call_operand.hbm [shape: f32[16,128], index: 1, kind: input, shape index: {}]
  %s2 = inlined_call_operand.hbm [shape: f32[1,1], index: 2, kind: output, shape index: {}]
  %s3 = sld [smem:[#allocation0]]
  $region26: #{tpu_custom_call.1} parent=0
    _
  %s5 = ssub.s32 1, %s3
  %s6 = scalar_select 0, %s5, %s3
  $region1: #{tpu_custom_call.1} parent=0
    #allocation2 [shape = 'u8[8192]{0}', space=vmem, size = 0x2000, scoped, tag = 'input window, operand 0, single buffered']
    #allocation3 [shape = 's32[1]{0}', space=sflag, size = 0x4, scoped, tag = 'scoped memory for tpu_custom_call.1']
    #allocation4 [shape = 's32[1]{0}', space=sflag, size = 0x4, scoped, tag = 'scoped memory for tpu_custom_call.1']
    #allocation5 [shape = 'u8[8192]{0}', space=vmem, size = 0x2000, scoped, tag = 'input window, operand 1, single buffered']
    #allocation6 [shape = 's32[1]{0}', space=sflag, size = 0x4, scoped, tag = 'scoped memory for tpu_custom_call.1']
    #allocation7 [shape = 'u8[512]{0}', space=vmem, size = 0x400, scoped, tag = 'output window, operand 0, single buffered']
    %7 = vsyncpa [#allocation3], 0
    %8 = vsyncpa [#allocation6], 0
    %9 = vsyncpa [#allocation4], 0
    // Predicated region
    $region2: #{tpu_custom_call.1} parent=1 // pred_check
      _
    $region3: #{tpu_custom_call.1} parent=1 // pred_check_branch
      %11 = sbr.rel (0) target = $region5
    $region4: #{tpu_custom_call.1} parent=1 // pred_region
      %13 = vsyncadd [#allocation3], 0
      %s14 = sshll.u32 %s0, 4
      %s15 = int_to_ptr.hbm [resolvable:$true] %s14
      %s16 = sshll.u32 [#allocation2], 4
      %s17 = int_to_ptr.vmem [resolvable:$true] %s16
      %22 = dma.hbm_to_vmem [thread:$0]  %s15, 256, %s17, [#allocation3], 128, 128, 8
    $region5: #{tpu_custom_call.1} parent=1 // pred_fallthru
      _
    // Predicated region
    $region6: #{tpu_custom_call.1} parent=1 // pred_check
      _
    $region7: #{tpu_custom_call.1} parent=1 // pred_check_branch
      %24 = sbr.rel (0) target = $region9
    $region8: #{tpu_custom_call.1} parent=1 // pred_region
      %26 = vsyncadd [#allocation6], 0
      %s27 = sshll.u32 %s1, 4
      %s28 = int_to_ptr.hbm [resolvable:$true] %s27
      %s29 = sshll.u32 [#allocation5], 4
      %s30 = int_to_ptr.vmem [resolvable:$true] %s29
      %35 = dma.hbm_to_vmem [thread:$0]  %s28, 256, %s30, [#allocation6], 128, 128, 8
    $region9: #{tpu_custom_call.1} parent=1 // pred_fallthru
      _
    // Predicated region
    $region10: #{tpu_custom_call.1} parent=1 // pred_check
      _
    $region11: #{tpu_custom_call.1} parent=1 // pred_check_branch
      %37 = sbr.rel (0) target = $region13
    $region12: #{tpu_custom_call.1} parent=1 // pred_region
      %39 = dma.done [#allocation3], 256
    $region13: #{tpu_custom_call.1} parent=1 // pred_fallthru
      _
    // Predicated region
    $region14: #{tpu_custom_call.1} parent=1 // pred_check
      _
    $region15: #{tpu_custom_call.1} parent=1 // pred_check_branch
      %41 = sbr.rel (0) target = $region17
    $region16: #{tpu_custom_call.1} parent=1 // pred_region
      %43 = dma.done [#allocation6], 256
    $region17: #{tpu_custom_call.1} parent=1 // pred_fallthru
      _
    %v44 = vld [vmem:[#allocation2] sm:$0xff]
    %v45 = vld [vmem:[#allocation2 + $0x8] sm:$0xff]
    %v46 = vld [vmem:[#allocation5] sm:$0xff]
    %v47 = vld [vmem:[#allocation5 + $0x8] sm:$0xff]
    %v48 = vsub.f32 %v44, %v46
    %v49 = vsub.f32 %v45, %v47
    %v50 = vmul.f32 %v48, %v48
    %v51 = vmul.f32 %v49, %v49
    %v52 = vadd.f32 %v50, %v51
    %v53 = vadd.f32 %v52, 0.0
    %54 = vadd.xlane.f32.xlu0 %v53
    %v55 = vpop.xlane.xlu0 %54
    %v56 = vrot.slane %v55, 4
    %v57 = vadd.f32 %v55, %v56
    %v58 = vrot.slane %v57, 2
    %v59 = vadd.f32 %v57, %v58
    %v60 = vrot.slane %v59, 1
    %v61 = vadd.f32 %v59, %v60
    %s62 = vtos %v61
    %s63 = smul.f32 %s62, 0.00048828125
    %v64 = vstv %s63
    %v65 = vrsqrt.pop %v64
    %v66 = vmul.f32 %v65, %v64
    %v67 = vmul.f32 %v66, %v65
    %v68 = vmul.f32 0.5, %v67
    %v69 = vsub.f32 1.5, %v68
    %v70 = vmul.f32 %v65, %v69
    %v71 = vmul.f32 %v64, %v70
    %vm72 = vcmp.eq.f32.partialorder %v64, inf
    %v73 = vsel %vm72, %v64, %v71
    %vm74 = vcmp.eq.f32.partialorder %v64, 0.0
    %v75 = vand.u32 %v64, 2147483648
    %v76 = vsel %vm74, %v75, %v73
    %s77 = vtos %v76
    %v78 = vstv %s77
    %vm79 = vcmask 0
    %80 = vst.msk [vmem:[#allocation7] sm:$0x1] %vm79, %v78
    // Predicated region
    $region18: #{tpu_custom_call.1} parent=1 // pred_check
      _
    $region19: #{tpu_custom_call.1} parent=1 // pred_check_branch
      %82 = sbr.rel (0) target = $region21
    $region20: #{tpu_custom_call.1} parent=1 // pred_region
      %84 = vsyncadd [#allocation4], 0
      %s86 = sshll.u32 [#allocation7], 4
      %s87 = int_to_ptr.vmem [resolvable:$true] %s86
      %s88 = sshll.u32 %s2, 4
      %s89 = int_to_ptr.hbm [resolvable:$true] %s88
      %91 = dma.vmem_to_hbm [thread:$0]  %s87, 16, %s89, [#allocation4]
    $region21: #{tpu_custom_call.1} parent=1 // pred_fallthru
      _
    // Predicated region
    $region22: #{tpu_custom_call.1} parent=1 // pred_check
      _
    $region23: #{tpu_custom_call.1} parent=1 // pred_check_branch
      %93 = sbr.rel (0) target = $region25
    $region24: #{tpu_custom_call.1} parent=1 // pred_region
      %95 = dma.done [#allocation4], 16
    $region25: #{tpu_custom_call.1} parent=1 // pred_fallthru
      _
    %96 = vsyncpa [#allocation3], 1
    %97 = vsyncpa [#allocation6], 1
    %98 = vsyncpa [#allocation4], 1

</llo_original>
